<compile_context>
chip_gen: v5e
topology: v5e:2x2
jax: 0.10.0
libtpu: 0.0.40
codegen_flags: <defaults>
</compile_context>

<pallas_src>
import functools
import numpy as np
import jax
import jax.numpy as jnp
from jax import lax
from jax.experimental import pallas as pl
from jax.experimental.pallas import tpu as pltpu

EPS = 1e-5          # InstanceNorm2d default eps
NEG_SLOPE = 0.01    # nn.LeakyReLU default negative_slope


def _leaky(x):
    return jnp.where(x >= 0, x, NEG_SLOPE * x)


# --------------------------- Pallas kernel ------------------------------
def _resblock_kernel(x_ref, bw1_ref, b1_ref, bw2_ref, b2b_ref, bwb_ref,
                     s1_ref, s2_ref, out_ref, *, spatial_w):
    # x_ref  : (Nb, H, W*Cin_pad)     lane index = w*Cin_pad + ci
    # bw1_ref: (W*Cin_pad, 3*W*Cout)  banded conv1 weight (kh = 0,1,2 blocks)
    # b1_ref : (1, W*Cout)            conv1 bias tiled over W
    # bw2_ref: (W*Cout, 3*W*Cout)     banded conv2 weight
    # b2b_ref: (1, W*Cout)            (conv2 bias + bypass bias) tiled over W
    # bwb_ref: (W*Cin_pad, W*Cout)    block-diagonal 1x1 bypass weight
    # s1_ref : (W*Cin_pad, W*Cin_pad) channel sum/broadcast matrix (input)
    # s2_ref : (W*Cout, W*Cout)       channel sum/broadcast matrix (hidden)
    # out_ref: (Nb, H, W*Cout)
    Nb, H, WCi = x_ref.shape
    WCo = out_ref.shape[2]
    NbH = Nb * H
    inv_hw = 1.0 / float(H * spatial_w)

    x3 = x_ref[...]                                        # (Nb, H, WCi)

    def inorm_leaky(t3, s_ref):
        # One-pass per-sample per-channel InstanceNorm + LeakyReLU, staying
        # lane-dense.  The single matmul against s_ref both reduces over the
        # W lane groups and broadcasts the per-channel stats back to every
        # lane of that channel; mean and E[x^2] share one MXU push.
        nb = t3.shape[0]
        colsum = jnp.sum(t3, axis=1)                       # (Nb, WC)
        sqsum = jnp.sum(t3 * t3, axis=1)                   # (Nb, WC)
        stats = jnp.concatenate([colsum, sqsum], axis=0)   # (2*Nb, WC)
        red = jnp.dot(stats, s_ref[...],
                      preferred_element_type=jnp.float32) * inv_hw
        mean = red[:nb]                                    # (Nb, WC)
        ex2 = red[nb:]
        var = ex2 - mean * mean                            # biased variance
        tn = (t3 - mean[:, None, :]) * lax.rsqrt(var + EPS)[:, None, :]
        return _leaky(tn)

    # Narrow (NbH, 1) row masks for the per-sample top/bottom padding rows of
    # the vertical conv taps (also kill cross-sample leakage when Nb > 1);
    # jnp.where broadcasts them across the lanes.
    row = lax.broadcasted_iota(jnp.int32, (NbH, 1), 0)
    top_edge = (row % H) == 0
    bot_edge = (row % H) == (H - 1)

    def conv3x3(t2, bw_ref):
        # t2: (Nb*H, W*C_in_of_conv).  Single matmul; the three vertical taps
        # (lane blocks kh = 0,1,2) are combined with sublane rolls on the
        # otherwise idle XLU + masks for the zero-padded border rows.
        y = jnp.dot(t2, bw_ref[...], preferred_element_type=jnp.float32)
        y_up = y[:, :WCo]            # kh = 0 taps: contribute to row h+1
        y_mid = y[:, WCo:2 * WCo]    # kh = 1 taps
        y_dn = y[:, 2 * WCo:]        # kh = 2 taps: contribute to row h-1
        up = jnp.where(top_edge, 0.0, pltpu.roll(y_up, 1, 0))
        dn = jnp.where(bot_edge, 0.0, pltpu.roll(y_dn, NbH - 1, 0))
        return y_mid + up + dn

    # ---- bn (InstanceNorm) -> LeakyReLU -> conv1 (+ bias) -------------
    xn2 = inorm_leaky(x3, s1_ref).reshape(NbH, WCi)
    h1 = conv3x3(xn2, bw1_ref) + b1_ref[...]               # (NbH, WCo)

    # ---- bn2 -> LeakyReLU -> conv2 -------------------------------------
    h1n2 = inorm_leaky(h1.reshape(Nb, H, WCo), s2_ref).reshape(NbH, WCo)
    h2 = conv3x3(h1n2, bw2_ref)

    # ---- 1x1 bypass on the ORIGINAL input; fold (b2 + bb) + residual ---
    byp = jnp.dot(x3.reshape(NbH, WCi), bwb_ref[...],
                  preferred_element_type=jnp.float32)
    out = h2 + byp + b2b_ref[...]
    out_ref[...] = out.reshape(Nb, H, WCo)


# ------------------ host-side weight re-packing (once) ------------------
def _banded_conv3x3(w_hwio, W):
    """(3,3,Ci,Co) HWIO weight -> (W*Ci, 3*W*Co) banded matrix.

    Column block kh holds the vertical tap kh; within each block the
    horizontal taps + channel contraction form a band, so the 3x3 conv
    becomes one matmul plus two row shifts in the kernel.
    """
    _, _, Ci, Co = w_hwio.shape
    w = np.asarray(w_hwio, np.float32)
    out = np.zeros((W * Ci, 3 * W * Co), np.float32)
    for kh in range(3):
        base = kh * W * Co
        for wo in range(W):
            for kw in range(3):
                wi = wo + kw - 1
                if 0 <= wi < W:
                    out[wi * Ci:(wi + 1) * Ci,
                        base + wo * Co: base + (wo + 1) * Co] = w[kh, kw]
    return out


def _block_diag_1x1(w_io, W):
    Ci, Co = w_io.shape
    w = np.asarray(w_io, np.float32)
    out = np.zeros((W * Ci, W * Co), np.float32)
    for wo in range(W):
        out[wo * Ci:(wo + 1) * Ci, wo * Co:(wo + 1) * Co] = w
    return out


def _channel_sum_matrix(W, C):
    idx = np.arange(W * C)
    return (idx[:, None] % C == idx[None, :] % C).astype(np.float32)


def prepare_params(w1_oihw, b1, w2_oihw, b2, wb_oihw, bb, W):
    w1 = np.asarray(w1_oihw, np.float32)     # (Cout, Cin, 3, 3)
    w2 = np.asarray(w2_oihw, np.float32)     # (Cout, Cout, 3, 3)
    wb = np.asarray(wb_oihw, np.float32)     # (Cout, Cin, 1, 1)
    Cout, Cin = w1.shape[0], w1.shape[1]

    # Pad Cin so that W*Cin_pad is a multiple of 128: fully lane-dense input
    # loads and a full MXU K pass on v5e.  Only when 128 % W == 0.
    Cin_pad = Cin
    if (W * Cin) % 128 != 0 and 128 % W == 0:
        cmul = 128 // W
        Cin_pad = int(np.ceil(Cin / cmul) * cmul)

    def pad_in_ch(w):      # pad OIHW weight along the I (input-channel) dim
        if Cin_pad == Cin:
            return w
        return np.pad(w, ((0, 0), (0, Cin_pad - Cin), (0, 0), (0, 0)))

    w1p = pad_in_ch(w1)
    wbp = pad_in_ch(wb)

    w1_hwio = np.transpose(w1p, (2, 3, 1, 0))           # (3,3,Cin_pad,Cout)
    w2_hwio = np.transpose(w2, (2, 3, 1, 0))             # (3,3,Cout,Cout)
    wb_io = np.transpose(wbp[:, :, 0, 0], (1, 0))        # (Cin_pad,Cout)

    b1_row = np.tile(np.asarray(b1, np.float32), W)[None, :]
    # Pre-sum conv2 bias + bypass bias into a single row (one fewer
    # broadcast-add and one fewer grid-invariant input in the kernel).
    b2b_row = np.tile(np.asarray(b2, np.float32)
                      + np.asarray(bb, np.float32), W)[None, :]

    return dict(
        cin=Cin,
        cin_pad=Cin_pad,
        bw1=jnp.asarray(_banded_conv3x3(w1_hwio, W)),
        b1=jnp.asarray(b1_row),
        bw2=jnp.asarray(_banded_conv3x3(w2_hwio, W)),
        b2b=jnp.asarray(b2b_row),
        bwb=jnp.asarray(_block_diag_1x1(wb_io, W)),
        s1=jnp.asarray(_channel_sum_matrix(W, Cin_pad)),
        s2=jnp.asarray(_channel_sum_matrix(W, Cout)),
    )


def _pick_samples_per_block(N, H, target_m=256):
    """Largest Nb dividing N with Nb*H <= target_m (fills the MXU M-dim),
    while keeping the grid length >= 2 when N >= 2 (megacore on v7x)."""
    best = 1
    for nb in range(1, N + 1):
        if N % nb == 0 and nb * H <= target_m:
            best = nb
    if N >= 2 and N // best < 2:
        for nb in range(best, 0, -1):
            if N % nb == 0 and N // nb >= 2:
                best = nb
                break
    return best


# ------------------------------ wrapper ----------------------------------
def resblock2d_forward(x_nchw, params, *, samples_per_block=None):
    """x_nchw: (N, Cin, H, W) f32; params from prepare_params."""
    N, Cin, H, W = x_nchw.shape
    WCo = params["b1"].shape[1]
    Cout = WCo // W
    Cin_pad = params["cin_pad"]
    WCi = W * Cin_pad

    if samples_per_block is None:
        samples_per_block = _pick_samples_per_block(N, H)
    Nb = samples_per_block
    assert N % Nb == 0

    # NCHW -> lane-dense (N, H, W*Cin_pad)  (lane = w*Cin_pad + ci)
    x_nhwc = jnp.transpose(x_nchw, (0, 2, 3, 1))
    if Cin_pad != Cin:
        x_nhwc = jnp.pad(x_nhwc, ((0, 0), (0, 0), (0, 0), (0, Cin_pad - Cin)))
    x_lanes = x_nhwc.reshape(N, H, WCi)

    kernel = functools.partial(_resblock_kernel, spatial_w=W)

    # Advisory cost estimate so XLA schedules the surrounding layout
    # transposes sensibly around the custom call.
    flops = int(2 * N * H * (WCi * 3 * WCo + WCo * 3 * WCo + WCi * WCo))
    bytes_accessed = int(4 * (x_lanes.size + N * H * WCo
                              + params["bw1"].size + params["bw2"].size
                              + params["bwb"].size + params["s1"].size
                              + params["s2"].size + 2 * WCo))
    transcendentals = int(N * (WCi + WCo))   # rsqrt per sample/channel-lane

    out = pl.pallas_call(
        kernel,
        out_shape=jax.ShapeDtypeStruct((N, H, WCo), jnp.float32),
        grid_spec=pltpu.PrefetchScalarGridSpec(
            num_scalar_prefetch=0,
            grid=(N // Nb,),
            in_specs=[
                pl.BlockSpec((Nb, H, WCi), lambda n: (n, 0, 0)),
                pl.BlockSpec(params["bw1"].shape, lambda n: (0, 0)),
                pl.BlockSpec(params["b1"].shape, lambda n: (0, 0)),
                pl.BlockSpec(params["bw2"].shape, lambda n: (0, 0)),
                pl.BlockSpec(params["b2b"].shape, lambda n: (0, 0)),
                pl.BlockSpec(params["bwb"].shape, lambda n: (0, 0)),
                pl.BlockSpec(params["s1"].shape, lambda n: (0, 0)),
                pl.BlockSpec(params["s2"].shape, lambda n: (0, 0)),
            ],
            out_specs=pl.BlockSpec((Nb, H, WCo), lambda n: (n, 0, 0)),
        ),
        compiler_params=pltpu.CompilerParams(
            dimension_semantics=("parallel",),        # megacore-shard batch
            vmem_limit_bytes=48 * 1024 * 1024),       # headroom, < v7x 64MiB
        cost_estimate=pl.CostEstimate(
            flops=flops,
            transcendentals=transcendentals,
            bytes_accessed=bytes_accessed),
    )(x_lanes, params["bw1"], params["b1"], params["bw2"], params["b2b"],
      params["bwb"], params["s1"], params["s2"])

    # (N, H, W*Cout) -> NCHW
    return jnp.transpose(out.reshape(N, H, W, Cout), (0, 3, 1, 2))


# ----------------------- parameter init (deterministic) -----------------
def xavier_uniform_oihw(key, out_ch, in_ch, k):
    fan_in = in_ch * k * k
    fan_out = out_ch * k * k
    bound = float(np.sqrt(6.0 / (fan_in + fan_out)))
    return jax.random.uniform(key, (out_ch, in_ch, k, k), jnp.float32,
                              -bound, bound)


def default_bias(key, out_ch, in_ch, k):
    bound = 1.0 / float(np.sqrt(in_ch * k * k))
    return jax.random.uniform(key, (out_ch,), jnp.float32, -bound, bound)


def kaiming_like_uniform_oihw(key, out_ch, in_ch, k):
    bound = 1.0 / float(np.sqrt(in_ch * k * k))
    return jax.random.uniform(key, (out_ch, in_ch, k, k), jnp.float32,
                              -bound, bound)


# ----------------------- pure-JAX reference (NCHW, PyTorch semantics) ----
def ref_forward(x, w1_oihw, b1, w2_oihw, b2, wb_oihw, bb):
    def inorm(t):
        m = jnp.mean(t, axis=(2, 3), keepdims=True)
        v = jnp.mean((t - m) ** 2, axis=(2, 3), keepdims=True)
        return (t - m) * lax.rsqrt(v + EPS)

    def conv(t, w, b, pad):
        y = lax.conv_general_dilated(
            t, w, (1, 1), [(pad, pad), (pad, pad)],
            dimension_numbers=('NCHW', 'OIHW', 'NCHW'))
        return y + b[None, :, None, None]

    h = conv(_leaky(inorm(x)), w1_oihw, b1, 1)
    h = conv(_leaky(inorm(h)), w2_oihw, b2, 1)
    return h + conv(x, wb_oihw, bb, 0)


if __name__ == "__main__":
    N, Cin, Cout, H, W = 2, 4, 8, 16, 16

    key = jax.random.PRNGKey(0)
    kx, k1, kb1, k2, kb2, kb, kbb = jax.random.split(key, 7)

    x = jax.random.normal(kx, (N, Cin, H, W), jnp.float32)

    # conv1 / conv2: xavier_uniform weights (gain 1.0), default-style biases
    w1_oihw = xavier_uniform_oihw(k1, Cout, Cin, 3)
    b1 = default_bias(kb1, Cout, Cin, 3)
    w2_oihw = xavier_uniform_oihw(k2, Cout, Cout, 3)
    b2 = default_bias(kb2, Cout, Cout, 3)
    # bypass 1x1 conv (present because in_ch != out_ch)
    wb_oihw = kaiming_like_uniform_oihw(kb, Cout, Cin, 1)
    bb = default_bias(kbb, Cout, Cin, 1)

    params = prepare_params(w1_oihw, b1, w2_oihw, b2, wb_oihw, bb, W)

    out = resblock2d_forward(x, params)         # Nb auto-picked
    out = jax.block_until_ready(out)

    ref = ref_forward(x, w1_oihw, b1, w2_oihw, b2, wb_oihw, bb)
    np.testing.assert_allclose(np.asarray(out), np.asarray(ref),
                               rtol=1e-4, atol=1e-4)

    print("KERNEL_OK")
</pallas_src>

<mosaic_0001>
module attributes {stable_mosaic.version = 11 : i64} {
  func.func @_resblock_kernel(%arg0: i32, %arg1: memref<1x16x128xf32, #tpu.memory_space<vmem>>, %arg2: memref<128x384xf32, #tpu.memory_space<vmem>>, %arg3: memref<1x128xf32, #tpu.memory_space<vmem>>, %arg4: memref<128x384xf32, #tpu.memory_space<vmem>>, %arg5: memref<1x128xf32, #tpu.memory_space<vmem>>, %arg6: memref<128x128xf32, #tpu.memory_space<vmem>>, %arg7: memref<128x128xf32, #tpu.memory_space<vmem>>, %arg8: memref<128x128xf32, #tpu.memory_space<vmem>>, %arg9: memref<1x16x128xf32, #tpu.memory_space<vmem>>) attributes {dimension_semantics = [#tpu.dimension_semantics<parallel>], iteration_bounds = array<i64: 2>, scalar_prefetch = 0 : i64, scratch_operands = 0 : i64, tpu.core_type = #tpu.core_type<tc>, window_params = [{transform_indices = @transform_0, window_bounds = array<i64: 1, 16, 128>}, {pipeline_mode = #tpu.pipeline_mode<synchronous>, transform_indices = @transform_1, window_bounds = array<i64: 128, 384>}, {pipeline_mode = #tpu.pipeline_mode<synchronous>, transform_indices = @transform_2, window_bounds = array<i64: 1, 128>}, {pipeline_mode = #tpu.pipeline_mode<synchronous>, transform_indices = @transform_3, window_bounds = array<i64: 128, 384>}, {pipeline_mode = #tpu.pipeline_mode<synchronous>, transform_indices = @transform_4, window_bounds = array<i64: 1, 128>}, {pipeline_mode = #tpu.pipeline_mode<synchronous>, transform_indices = @transform_5, window_bounds = array<i64: 128, 128>}, {pipeline_mode = #tpu.pipeline_mode<synchronous>, transform_indices = @transform_6, window_bounds = array<i64: 128, 128>}, {pipeline_mode = #tpu.pipeline_mode<synchronous>, transform_indices = @transform_7, window_bounds = array<i64: 128, 128>}, {transform_indices = @transform_8, window_bounds = array<i64: 1, 16, 128>}]} {
    %c0 = arith.constant 0 : index
    %c0_0 = arith.constant 0 : index
    %c0_1 = arith.constant 0 : index
    %0 = vector.load %arg1[%c0, %c0_0, %c0_1] : memref<1x16x128xf32, #tpu.memory_space<vmem>>, vector<1x16x128xf32>
    %1 = tpu.iota {dimensions = array<i32: 0>} : vector<16x1xi32>
    %c16_i32 = arith.constant 16 : i32
    %c0_i32 = arith.constant 0 : i32
    %2 = arith.cmpi eq, %c16_i32, %c0_i32 : i32
    %c1_i32 = arith.constant 1 : i32
    %3 = arith.select %2, %c1_i32, %c16_i32 : i32
    %4 = vector.broadcast %3 : i32 to vector<16x1xi32>
    %5 = arith.remsi %1, %4 : vector<16x1xi32>
    %c0_i32_2 = arith.constant 0 : i32
    %6 = vector.broadcast %c0_i32_2 : i32 to vector<16x1xi32>
    %7 = arith.cmpi ne, %5, %6 : vector<16x1xi32>
    %c0_i32_3 = arith.constant 0 : i32
    %8 = vector.broadcast %c0_i32_3 : i32 to vector<16x1xi32>
    %9 = arith.cmpi slt, %5, %8 : vector<16x1xi32>
    %c0_i32_4 = arith.constant 0 : i32
    %10 = arith.cmpi slt, %3, %c0_i32_4 : i32
    %11 = vector.broadcast %10 : i1 to vector<16x1xi1>
    %12 = vector.broadcast %11 : vector<16x1xi1> to vector<16x1xi1>
    %13 = arith.xori %9, %12 : vector<16x1xi1>
    %14 = arith.andi %13, %7 : vector<16x1xi1>
    %15 = vector.broadcast %3 : i32 to vector<16x1xi32>
    %16 = arith.addi %5, %15 : vector<16x1xi32>
    %17 = arith.select %14, %16, %5 : vector<16x1xi1>, vector<16x1xi32>
    %c0_i32_5 = arith.constant 0 : i32
    %18 = vector.broadcast %c0_i32_5 : i32 to vector<16x1xi32>
    %19 = arith.cmpi eq, %17, %18 : vector<16x1xi32>
    %c16_i32_6 = arith.constant 16 : i32
    %c0_i32_7 = arith.constant 0 : i32
    %20 = arith.cmpi eq, %c16_i32_6, %c0_i32_7 : i32
    %c1_i32_8 = arith.constant 1 : i32
    %21 = arith.select %20, %c1_i32_8, %c16_i32_6 : i32
    %22 = vector.broadcast %21 : i32 to vector<16x1xi32>
    %23 = arith.remsi %1, %22 : vector<16x1xi32>
    %c0_i32_9 = arith.constant 0 : i32
    %24 = vector.broadcast %c0_i32_9 : i32 to vector<16x1xi32>
    %25 = arith.cmpi ne, %23, %24 : vector<16x1xi32>
    %c0_i32_10 = arith.constant 0 : i32
    %26 = vector.broadcast %c0_i32_10 : i32 to vector<16x1xi32>
    %27 = arith.cmpi slt, %23, %26 : vector<16x1xi32>
    %c0_i32_11 = arith.constant 0 : i32
    %28 = arith.cmpi slt, %21, %c0_i32_11 : i32
    %29 = vector.broadcast %28 : i1 to vector<16x1xi1>
    %30 = vector.broadcast %29 : vector<16x1xi1> to vector<16x1xi1>
    %31 = arith.xori %27, %30 : vector<16x1xi1>
    %32 = arith.andi %31, %25 : vector<16x1xi1>
    %33 = vector.broadcast %21 : i32 to vector<16x1xi32>
    %34 = arith.addi %23, %33 : vector<16x1xi32>
    %35 = arith.select %32, %34, %23 : vector<16x1xi1>, vector<16x1xi32>
    %c15_i32 = arith.constant 15 : i32
    %36 = vector.broadcast %c15_i32 : i32 to vector<16x1xi32>
    %37 = arith.cmpi eq, %35, %36 : vector<16x1xi32>
    %cst = arith.constant dense<0.000000e+00> : vector<1x128xf32>
    %38 = vector.multi_reduction <add>, %0, %cst [1] : vector<1x16x128xf32> to vector<1x128xf32>
    %39 = arith.mulf %0, %0 : vector<1x16x128xf32>
    %cst_12 = arith.constant dense<0.000000e+00> : vector<1x128xf32>
    %40 = vector.multi_reduction <add>, %39, %cst_12 [1] : vector<1x16x128xf32> to vector<1x128xf32>
    %41 = tpu.concatenate %38, %40 in 0 : vector<1x128xf32>, vector<1x128xf32> -> vector<2x128xf32>
    %c0_13 = arith.constant 0 : index
    %c0_14 = arith.constant 0 : index
    %42 = vector.load %arg7[%c0_13, %c0_14] : memref<128x128xf32, #tpu.memory_space<vmem>>, vector<128x128xf32>
    %cst_15 = arith.constant dense<0.000000e+00> : vector<2x128xf32>
    %43 = tpu.matmul %41, %42, %cst_15 {dimension_numbers = #tpu.dot_dimension_numbers<[1], [0], [0], [1], [0, 0, 1, 1], [], []>} : vector<2x128xf32>, vector<128x128xf32>, vector<2x128xf32> -> vector<2x128xf32>
    %cst_16 = arith.constant 3.906250e-03 : f32
    %44 = vector.broadcast %cst_16 : f32 to vector<2x128xf32>
    %45 = arith.mulf %43, %44 : vector<2x128xf32>
    %46 = vector.extract_strided_slice %45 {offsets = [0, 0], sizes = [1, 128], strides = [1, 1]} : vector<2x128xf32> to vector<1x128xf32>
    %47 = vector.extract_strided_slice %45 {offsets = [1, 0], sizes = [1, 128], strides = [1, 1]} : vector<2x128xf32> to vector<1x128xf32>
    %48 = arith.mulf %46, %46 : vector<1x128xf32>
    %49 = arith.subf %47, %48 : vector<1x128xf32>
    %50 = vector.shape_cast %46 : vector<1x128xf32> to vector<1x1x128xf32>
    %51 = vector.broadcast %50 : vector<1x1x128xf32> to vector<1x16x128xf32>
    %52 = arith.subf %0, %51 : vector<1x16x128xf32>
    %cst_17 = arith.constant 9.99999974E-6 : f32
    %53 = vector.broadcast %cst_17 : f32 to vector<1x128xf32>
    %54 = arith.addf %49, %53 : vector<1x128xf32>
    %55 = math.rsqrt %54 : vector<1x128xf32>
    %56 = vector.shape_cast %55 : vector<1x128xf32> to vector<1x1x128xf32>
    %57 = vector.broadcast %56 : vector<1x1x128xf32> to vector<1x16x128xf32>
    %58 = arith.mulf %52, %57 : vector<1x16x128xf32>
    %cst_18 = arith.constant 0.000000e+00 : f32
    %59 = vector.broadcast %cst_18 : f32 to vector<1x16x128xf32>
    %60 = arith.cmpf oge, %58, %59 : vector<1x16x128xf32>
    %cst_19 = arith.constant 0.00999999977 : f32
    %61 = vector.broadcast %cst_19 : f32 to vector<1x16x128xf32>
    %62 = arith.mulf %61, %58 : vector<1x16x128xf32>
    %63 = arith.select %60, %58, %62 : vector<1x16x128xi1>, vector<1x16x128xf32>
    %64 = vector.shape_cast %63 : vector<1x16x128xf32> to vector<16x128xf32>
    %c0_20 = arith.constant 0 : index
    %c0_21 = arith.constant 0 : index
    %65 = vector.load %arg2[%c0_20, %c0_21] : memref<128x384xf32, #tpu.memory_space<vmem>>, vector<128x384xf32>
    %cst_22 = arith.constant dense<0.000000e+00> : vector<16x384xf32>
    %66 = tpu.matmul %64, %65, %cst_22 {dimension_numbers = #tpu.dot_dimension_numbers<[1], [0], [0], [1], [0, 0, 1, 1], [], []>} : vector<16x128xf32>, vector<128x384xf32>, vector<16x384xf32> -> vector<16x384xf32>
    %67 = vector.extract_strided_slice %66 {offsets = [0, 0], sizes = [16, 128], strides = [1, 1]} : vector<16x384xf32> to vector<16x128xf32>
    %68 = vector.extract_strided_slice %66 {offsets = [0, 128], sizes = [16, 128], strides = [1, 1]} : vector<16x384xf32> to vector<16x128xf32>
    %69 = vector.extract_strided_slice %66 {offsets = [0, 256], sizes = [16, 128], strides = [1, 1]} : vector<16x384xf32> to vector<16x128xf32>
    %c1_i32_23 = arith.constant 1 : i32
    %70 = tpu.dynamic_rotate %67 by %c1_i32_23 dim 0 : vector<16x128xf32>, i32 -> vector<16x128xf32>
    %cst_24 = arith.constant 0.000000e+00 : f32
    %71 = vector.shape_cast %19 : vector<16x1xi1> to vector<16x1xi1>
    %72 = vector.broadcast %71 : vector<16x1xi1> to vector<16x128xi1>
    %73 = vector.broadcast %cst_24 : f32 to vector<16x128xf32>
    %74 = arith.select %72, %73, %70 : vector<16x128xi1>, vector<16x128xf32>
    %c15_i32_25 = arith.constant 15 : i32
    %75 = tpu.dynamic_rotate %69 by %c15_i32_25 dim 0 : vector<16x128xf32>, i32 -> vector<16x128xf32>
    %cst_26 = arith.constant 0.000000e+00 : f32
    %76 = vector.shape_cast %37 : vector<16x1xi1> to vector<16x1xi1>
    %77 = vector.broadcast %76 : vector<16x1xi1> to vector<16x128xi1>
    %78 = vector.broadcast %cst_26 : f32 to vector<16x128xf32>
    %79 = arith.select %77, %78, %75 : vector<16x128xi1>, vector<16x128xf32>
    %80 = arith.addf %68, %74 : vector<16x128xf32>
    %81 = arith.addf %80, %79 : vector<16x128xf32>
    %c0_27 = arith.constant 0 : index
    %c0_28 = arith.constant 0 : index
    %82 = vector.load %arg3[%c0_27, %c0_28] : memref<1x128xf32, #tpu.memory_space<vmem>>, vector<1x128xf32>
    %83 = vector.broadcast %82 : vector<1x128xf32> to vector<16x128xf32>
    %84 = arith.addf %81, %83 : vector<16x128xf32>
    %85 = vector.shape_cast %84 : vector<16x128xf32> to vector<1x16x128xf32>
    %cst_29 = arith.constant dense<0.000000e+00> : vector<1x128xf32>
    %86 = vector.multi_reduction <add>, %85, %cst_29 [1] : vector<1x16x128xf32> to vector<1x128xf32>
    %87 = arith.mulf %85, %85 : vector<1x16x128xf32>
    %cst_30 = arith.constant dense<0.000000e+00> : vector<1x128xf32>
    %88 = vector.multi_reduction <add>, %87, %cst_30 [1] : vector<1x16x128xf32> to vector<1x128xf32>
    %89 = tpu.concatenate %86, %88 in 0 : vector<1x128xf32>, vector<1x128xf32> -> vector<2x128xf32>
    %c0_31 = arith.constant 0 : index
    %c0_32 = arith.constant 0 : index
    %90 = vector.load %arg8[%c0_31, %c0_32] : memref<128x128xf32, #tpu.memory_space<vmem>>, vector<128x128xf32>
    %cst_33 = arith.constant dense<0.000000e+00> : vector<2x128xf32>
    %91 = tpu.matmul %89, %90, %cst_33 {dimension_numbers = #tpu.dot_dimension_numbers<[1], [0], [0], [1], [0, 0, 1, 1], [], []>} : vector<2x128xf32>, vector<128x128xf32>, vector<2x128xf32> -> vector<2x128xf32>
    %cst_34 = arith.constant 3.906250e-03 : f32
    %92 = vector.broadcast %cst_34 : f32 to vector<2x128xf32>
    %93 = arith.mulf %91, %92 : vector<2x128xf32>
    %94 = vector.extract_strided_slice %93 {offsets = [0, 0], sizes = [1, 128], strides = [1, 1]} : vector<2x128xf32> to vector<1x128xf32>
    %95 = vector.extract_strided_slice %93 {offsets = [1, 0], sizes = [1, 128], strides = [1, 1]} : vector<2x128xf32> to vector<1x128xf32>
    %96 = arith.mulf %94, %94 : vector<1x128xf32>
    %97 = arith.subf %95, %96 : vector<1x128xf32>
    %98 = vector.shape_cast %94 : vector<1x128xf32> to vector<1x1x128xf32>
    %99 = vector.broadcast %98 : vector<1x1x128xf32> to vector<1x16x128xf32>
    %100 = arith.subf %85, %99 : vector<1x16x128xf32>
    %cst_35 = arith.constant 9.99999974E-6 : f32
    %101 = vector.broadcast %cst_35 : f32 to vector<1x128xf32>
    %102 = arith.addf %97, %101 : vector<1x128xf32>
    %103 = math.rsqrt %102 : vector<1x128xf32>
    %104 = vector.shape_cast %103 : vector<1x128xf32> to vector<1x1x128xf32>
    %105 = vector.broadcast %104 : vector<1x1x128xf32> to vector<1x16x128xf32>
    %106 = arith.mulf %100, %105 : vector<1x16x128xf32>
    %cst_36 = arith.constant 0.000000e+00 : f32
    %107 = vector.broadcast %cst_36 : f32 to vector<1x16x128xf32>
    %108 = arith.cmpf oge, %106, %107 : vector<1x16x128xf32>
    %cst_37 = arith.constant 0.00999999977 : f32
    %109 = vector.broadcast %cst_37 : f32 to vector<1x16x128xf32>
    %110 = arith.mulf %109, %106 : vector<1x16x128xf32>
    %111 = arith.select %108, %106, %110 : vector<1x16x128xi1>, vector<1x16x128xf32>
    %112 = vector.shape_cast %111 : vector<1x16x128xf32> to vector<16x128xf32>
    %c0_38 = arith.constant 0 : index
    %c0_39 = arith.constant 0 : index
    %113 = vector.load %arg4[%c0_38, %c0_39] : memref<128x384xf32, #tpu.memory_space<vmem>>, vector<128x384xf32>
    %cst_40 = arith.constant dense<0.000000e+00> : vector<16x384xf32>
    %114 = tpu.matmul %112, %113, %cst_40 {dimension_numbers = #tpu.dot_dimension_numbers<[1], [0], [0], [1], [0, 0, 1, 1], [], []>} : vector<16x128xf32>, vector<128x384xf32>, vector<16x384xf32> -> vector<16x384xf32>
    %115 = vector.extract_strided_slice %114 {offsets = [0, 0], sizes = [16, 128], strides = [1, 1]} : vector<16x384xf32> to vector<16x128xf32>
    %116 = vector.extract_strided_slice %114 {offsets = [0, 128], sizes = [16, 128], strides = [1, 1]} : vector<16x384xf32> to vector<16x128xf32>
    %117 = vector.extract_strided_slice %114 {offsets = [0, 256], sizes = [16, 128], strides = [1, 1]} : vector<16x384xf32> to vector<16x128xf32>
    %c1_i32_41 = arith.constant 1 : i32
    %118 = tpu.dynamic_rotate %115 by %c1_i32_41 dim 0 : vector<16x128xf32>, i32 -> vector<16x128xf32>
    %cst_42 = arith.constant 0.000000e+00 : f32
    %119 = vector.shape_cast %19 : vector<16x1xi1> to vector<16x1xi1>
    %120 = vector.broadcast %119 : vector<16x1xi1> to vector<16x128xi1>
    %121 = vector.broadcast %cst_42 : f32 to vector<16x128xf32>
    %122 = arith.select %120, %121, %118 : vector<16x128xi1>, vector<16x128xf32>
    %c15_i32_43 = arith.constant 15 : i32
    %123 = tpu.dynamic_rotate %117 by %c15_i32_43 dim 0 : vector<16x128xf32>, i32 -> vector<16x128xf32>
    %cst_44 = arith.constant 0.000000e+00 : f32
    %124 = vector.shape_cast %37 : vector<16x1xi1> to vector<16x1xi1>
    %125 = vector.broadcast %124 : vector<16x1xi1> to vector<16x128xi1>
    %126 = vector.broadcast %cst_44 : f32 to vector<16x128xf32>
    %127 = arith.select %125, %126, %123 : vector<16x128xi1>, vector<16x128xf32>
    %128 = arith.addf %116, %122 : vector<16x128xf32>
    %129 = arith.addf %128, %127 : vector<16x128xf32>
    %130 = vector.shape_cast %0 : vector<1x16x128xf32> to vector<16x128xf32>
    %c0_45 = arith.constant 0 : index
    %c0_46 = arith.constant 0 : index
    %131 = vector.load %arg6[%c0_45, %c0_46] : memref<128x128xf32, #tpu.memory_space<vmem>>, vector<128x128xf32>
    %cst_47 = arith.constant dense<0.000000e+00> : vector<16x128xf32>
    %132 = tpu.matmul %130, %131, %cst_47 {dimension_numbers = #tpu.dot_dimension_numbers<[1], [0], [0], [1], [0, 0, 1, 1], [], []>} : vector<16x128xf32>, vector<128x128xf32>, vector<16x128xf32> -> vector<16x128xf32>
    %133 = arith.addf %129, %132 : vector<16x128xf32>
    %c0_48 = arith.constant 0 : index
    %c0_49 = arith.constant 0 : index
    %134 = vector.load %arg5[%c0_48, %c0_49] : memref<1x128xf32, #tpu.memory_space<vmem>>, vector<1x128xf32>
    %135 = vector.broadcast %134 : vector<1x128xf32> to vector<16x128xf32>
    %136 = arith.addf %133, %135 : vector<16x128xf32>
    %137 = vector.shape_cast %136 : vector<16x128xf32> to vector<1x16x128xf32>
    %c0_50 = arith.constant 0 : index
    %c0_51 = arith.constant 0 : index
    %c0_52 = arith.constant 0 : index
    %138 = vector.load %arg9[%c0_50, %c0_51, %c0_52] : memref<1x16x128xf32, #tpu.memory_space<vmem>>, vector<1x16x128xf32>
    tpu.vector_store %arg9[%c0_50, %c0_51, %c0_52], %137 {strides = array<i32>} : memref<1x16x128xf32, #tpu.memory_space<vmem>>, vector<1x16x128xf32>,
    return
  }
  func.func @transform_0(%arg0: i32) -> (i32, i32, i32) {
    %c0_i32 = arith.constant 0 : i32
    %c0_i32_0 = arith.constant 0 : i32
    %c0_i32_1 = arith.constant 0 : i32
    return %arg0, %c0_i32, %c0_i32_0 : i32, i32, i32
  }
  func.func @transform_1(%arg0: i32) -> (i32, i32) {
    %c0_i32 = arith.constant 0 : i32
    %c0_i32_0 = arith.constant 0 : i32
    %c0_i32_1 = arith.constant 0 : i32
    return %c0_i32, %c0_i32_0 : i32, i32
  }
  func.func @transform_2(%arg0: i32) -> (i32, i32) {
    %c0_i32 = arith.constant 0 : i32
    %c0_i32_0 = arith.constant 0 : i32
    %c0_i32_1 = arith.constant 0 : i32
    return %c0_i32, %c0_i32_0 : i32, i32
  }
  func.func @transform_3(%arg0: i32) -> (i32, i32) {
    %c0_i32 = arith.constant 0 : i32
    %c0_i32_0 = arith.constant 0 : i32
    %c0_i32_1 = arith.constant 0 : i32
    return %c0_i32, %c0_i32_0 : i32, i32
  }
  func.func @transform_4(%arg0: i32) -> (i32, i32) {
    %c0_i32 = arith.constant 0 : i32
    %c0_i32_0 = arith.constant 0 : i32
    %c0_i32_1 = arith.constant 0 : i32
    return %c0_i32, %c0_i32_0 : i32, i32
  }
  func.func @transform_5(%arg0: i32) -> (i32, i32) {
    %c0_i32 = arith.constant 0 : i32
    %c0_i32_0 = arith.constant 0 : i32
    %c0_i32_1 = arith.constant 0 : i32
    return %c0_i32, %c0_i32_0 : i32, i32
  }
  func.func @transform_6(%arg0: i32) -> (i32, i32) {
    %c0_i32 = arith.constant 0 : i32
    %c0_i32_0 = arith.constant 0 : i32
    %c0_i32_1 = arith.constant 0 : i32
    return %c0_i32, %c0_i32_0 : i32, i32
  }
  func.func @transform_7(%arg0: i32) -> (i32, i32) {
    %c0_i32 = arith.constant 0 : i32
    %c0_i32_0 = arith.constant 0 : i32
    %c0_i32_1 = arith.constant 0 : i32
    return %c0_i32, %c0_i32_0 : i32, i32
  }
  func.func @transform_8(%arg0: i32) -> (i32, i32, i32) {
    %c0_i32 = arith.constant 0 : i32
    %c0_i32_0 = arith.constant 0 : i32
    %c0_i32_1 = arith.constant 0 : i32
    return %arg0, %c0_i32, %c0_i32_0 : i32, i32, i32
  }
}

</mosaic_0001>

<llo_original>
// kernel: tpu_custom_call.1
$region0: #{tpu_custom_call.1}
  #allocation0 [shape = 'u32[]', space=smem, size = 0x4, offset = 0x4, fixed_abs, tag = 'smem constant byte address 0x4 - core index']
  #allocation1 [shape = 'u32[72,128]{1,0:T(1,128)}', space=vmem, size = 0x9000, scoped, tag = 'internal scratch']
  %s0 = inlined_call_operand.hbm [shape: f32[2,16,128], index: 0, kind: input, shape index: {}]
  %s1 = inlined_call_operand.hbm [shape: f32[128,384], index: 1, kind: input, shape index: {}]
  %s2 = inlined_call_operand.vmem [shape: f32[1,128], index: 2, kind: input, shape index: {}]
  %s3 = inlined_call_operand.hbm [shape: f32[128,384], index: 3, kind: input, shape index: {}]
  %s4 = inlined_call_operand.vmem [shape: f32[1,128], index: 4, kind: input, shape index: {}]
  %s5 = inlined_call_operand.hbm [shape: f32[128,128], index: 5, kind: input, shape index: {}]
  %s6 = inlined_call_operand.hbm [shape: f32[128,128], index: 6, kind: input, shape index: {}]
  %s7 = inlined_call_operand.hbm [shape: f32[128,128], index: 7, kind: input, shape index: {}]
  %s8 = inlined_call_operand.hbm [shape: f32[2,16,128], index: 8, kind: output, shape index: {}]
  %s9 = sld [smem:[#allocation0]]
  $region89: #{tpu_custom_call.1} parent=0
    _
  %s11 = ssub.s32 1, %s9
  %s12 = scalar_select 0, %s11, %s9
  $region1: #{tpu_custom_call.1} parent=0
    #allocation2 [shape = 'u8[16384]{0}', space=vmem, size = 0x4000, scoped, tag = 'input window, operand 0']
    #allocation3 [shape = 's32[2]{0}', space=sflag, size = 0x8, scoped, tag = 'scoped memory for tpu_custom_call.1']
    #allocation4 [shape = 's32[2]{0}', space=sflag, size = 0x8, scoped, tag = 'scoped memory for tpu_custom_call.1']
    #allocation5 [shape = 'u8[196608]{0}', space=vmem, size = 0x30000, scoped, tag = 'input window, operand 1, single buffered']
    #allocation6 [shape = 's32[1]{0}', space=sflag, size = 0x4, scoped, tag = 'scoped memory for tpu_custom_call.1']
    #allocation7 [shape = 'u8[196608]{0}', space=vmem, size = 0x30000, scoped, tag = 'input window, operand 3, single buffered']
    #allocation8 [shape = 'u8[65536]{0}', space=vmem, size = 0x10000, scoped, tag = 'input window, operand 5, single buffered']
    #allocation9 [shape = 's32[1]{0}', space=sflag, size = 0x4, scoped, tag = 'scoped memory for tpu_custom_call.1']
    #allocation10 [shape = 'u8[65536]{0}', space=vmem, size = 0x10000, scoped, tag = 'input window, operand 6, single buffered']
    #allocation11 [shape = 'u8[65536]{0}', space=vmem, size = 0x10000, scoped, tag = 'input window, operand 7, single buffered']
    #allocation12 [shape = 's32[1]{0}', space=sflag, size = 0x4, scoped, tag = 'scoped memory for tpu_custom_call.1']
    #allocation13 [shape = 'u8[16384]{0}', space=vmem, size = 0x4000, scoped, tag = 'output window, operand 0']
    %13 = vsyncpa [#allocation3], 0
    %s14 = scalar_lea.sflag [#allocation3], 1
    %15 = vsyncpa %s14, 0
    %16 = vsyncpa [#allocation6], 0
    %17 = vsyncpa [#allocation9], 0
    %18 = vsyncpa [#allocation12], 0
    %19 = vsyncpa [#allocation4], 0
    %s20 = scalar_lea.sflag [#allocation4], 1
    %21 = vsyncpa %s20, 0
    loop: start=0, step=1, limit=4
    $region2: #{tpu_custom_call.1} parent=1 // loop_pre_header
      _
    $region3: #{tpu_custom_call.1} parent=1 // loop_header
      %s23 = sphi 0, %s27
      %p24 = scmp.ge.s32.totalorder %s23, 4
      %s33 = sphi 0, %s35
      %s36 = sphi 0, %s33
      %s37 = sphi 0, %s36
      %s53 = sphi 0, %s37
      %s57 = sphi 0, %s57
      %s59 = sphi 0, %s57
      %s60 = sphi 0, %s59
      %s74 = sphi 0, %s60
      %s78 = sphi 0, %s78
      %s80 = sphi 0, %s78
      %s81 = sphi 0, %s80
      %s95 = sphi 0, %s81
      %s99 = sphi 0, %s99
      %s101 = sphi 0, %s99
      %s102 = sphi 0, %s101
      %s116 = sphi 0, %s102
      %s120 = sphi 0, %s120
      %s122 = sphi 0, %s120
      %s123 = sphi 0, %s122
      %s137 = sphi 0, %s123
      %s141 = sphi 0, %s141
      %s143 = sphi 0, %s141
      %s144 = sphi 0, %s143
      %s158 = sphi 0, %s144
      %s162 = sphi 0, %s162
      %s164 = sphi 0, %s162
      %s165 = sphi 0, %s164
      %s179 = sphi 0, %s165
      %s183 = sphi 0, %s183
      %s185 = sphi 0, %s183
      %s186 = sphi 0, %s185
      %s200 = sphi 0, %s186
      %s206 = sphi 0, %s208
      %s209 = sphi 0, %s206
      %s210 = sphi 0, %s209
      %s226 = sphi 0, %s210
    $region4: #{tpu_custom_call.1} parent=1 // loop_header_branch
      %26 = sbr.rel (%p24) target = $region8
    $region5: #{tpu_custom_call.1} parent=1 // loop_body
      %s28 = ssub.s32 %s23, 1
      %s29 = ssub.s32 %s23, 2
      %s30 = sadd.s32 %s23, 1
      %s31 = ssub.s32 %s23, %s30
      %p32 = scmp.eq.s32.totalorder %s31, 0
      %s34 = sadd.s32 %s33, 1
      %s35 = scalar_select %p32, %s33, %s34
      %p38 = pneg %p32
      %p39 = scmp.eq.s32.totalorder %s23, 1
      %p40 = por %p38, %p39
      %p41 = scmp.ne.s32.totalorder %s33, %s36
      %p42 = scmp.eq.s32.totalorder %s23, 0
      %p43 = por %p41, %p42
      %p44 = scmp.ne.s32.totalorder %s33, %s36
      %p45 = scmp.eq.s32.totalorder %s28, 1
      %p46 = por %p44, %p45
      %p47 = scmp.ne.s32.totalorder %s36, %s37
      %p48 = scmp.eq.s32.totalorder %s28, 0
      %p49 = por %p47, %p48
      %p50 = scmp.ne.s32.totalorder %s36, %s37
      %p51 = scmp.eq.s32.totalorder %s29, 1
      %p52 = por %p50, %p51
      %p54 = scmp.ne.s32.totalorder %s37, %s53
      %p55 = scmp.eq.s32.totalorder %s29, 0
      %p56 = por %p54, %p55
      %s58 = sadd.s32 %s57, 1
      %p61 = scmp.eq.s32.totalorder %s23, 1
      %p62 = scmp.ne.s32.totalorder %s57, %s59
      %p63 = scmp.eq.s32.totalorder %s23, 0
      %p64 = por %p62, %p63
      %p65 = scmp.ne.s32.totalorder %s57, %s59
      %p66 = scmp.eq.s32.totalorder %s28, 1
      %p67 = por %p65, %p66
      %p68 = scmp.ne.s32.totalorder %s59, %s60
      %p69 = scmp.eq.s32.totalorder %s28, 0
      %p70 = por %p68, %p69
      %p71 = scmp.ne.s32.totalorder %s59, %s60
      %p72 = scmp.eq.s32.totalorder %s29, 1
      %p73 = por %p71, %p72
      %p75 = scmp.ne.s32.totalorder %s60, %s74
      %p76 = scmp.eq.s32.totalorder %s29, 0
      %p77 = por %p75, %p76
      %s79 = sadd.s32 %s78, 1
      %p82 = scmp.eq.s32.totalorder %s23, 1
      %p83 = scmp.ne.s32.totalorder %s78, %s80
      %p84 = scmp.eq.s32.totalorder %s23, 0
      %p85 = por %p83, %p84
      %p86 = scmp.ne.s32.totalorder %s78, %s80
      %p87 = scmp.eq.s32.totalorder %s28, 1
      %p88 = por %p86, %p87
      %p89 = scmp.ne.s32.totalorder %s80, %s81
      %p90 = scmp.eq.s32.totalorder %s28, 0
      %p91 = por %p89, %p90
      %p92 = scmp.ne.s32.totalorder %s80, %s81
      %p93 = scmp.eq.s32.totalorder %s29, 1
      %p94 = por %p92, %p93
      %p96 = scmp.ne.s32.totalorder %s81, %s95
      %p97 = scmp.eq.s32.totalorder %s29, 0
      %p98 = por %p96, %p97
      %s100 = sadd.s32 %s99, 1
      %p103 = scmp.eq.s32.totalorder %s23, 1
      %p104 = scmp.ne.s32.totalorder %s99, %s101
      %p105 = scmp.eq.s32.totalorder %s23, 0
      %p106 = por %p104, %p105
      %p107 = scmp.ne.s32.totalorder %s99, %s101
      %p108 = scmp.eq.s32.totalorder %s28, 1
      %p109 = por %p107, %p108
      %p110 = scmp.ne.s32.totalorder %s101, %s102
      %p111 = scmp.eq.s32.totalorder %s28, 0
      %p112 = por %p110, %p111
      %p113 = scmp.ne.s32.totalorder %s101, %s102
      %p114 = scmp.eq.s32.totalorder %s29, 1
      %p115 = por %p113, %p114
      %p117 = scmp.ne.s32.totalorder %s102, %s116
      %p118 = scmp.eq.s32.totalorder %s29, 0
      %p119 = por %p117, %p118
      %s121 = sadd.s32 %s120, 1
      %p124 = scmp.eq.s32.totalorder %s23, 1
      %p125 = scmp.ne.s32.totalorder %s120, %s122
      %p126 = scmp.eq.s32.totalorder %s23, 0
      %p127 = por %p125, %p126
      %p128 = scmp.ne.s32.totalorder %s120, %s122
      %p129 = scmp.eq.s32.totalorder %s28, 1
      %p130 = por %p128, %p129
      %p131 = scmp.ne.s32.totalorder %s122, %s123
      %p132 = scmp.eq.s32.totalorder %s28, 0
      %p133 = por %p131, %p132
      %p134 = scmp.ne.s32.totalorder %s122, %s123
      %p135 = scmp.eq.s32.totalorder %s29, 1
      %p136 = por %p134, %p135
      %p138 = scmp.ne.s32.totalorder %s123, %s137
      %p139 = scmp.eq.s32.totalorder %s29, 0
      %p140 = por %p138, %p139
      %s142 = sadd.s32 %s141, 1
      %p145 = scmp.eq.s32.totalorder %s23, 1
      %p146 = scmp.ne.s32.totalorder %s141, %s143
      %p147 = scmp.eq.s32.totalorder %s23, 0
      %p148 = por %p146, %p147
      %p149 = scmp.ne.s32.totalorder %s141, %s143
      %p150 = scmp.eq.s32.totalorder %s28, 1
      %p151 = por %p149, %p150
      %p152 = scmp.ne.s32.totalorder %s143, %s144
      %p153 = scmp.eq.s32.totalorder %s28, 0
      %p154 = por %p152, %p153
      %p155 = scmp.ne.s32.totalorder %s143, %s144
      %p156 = scmp.eq.s32.totalorder %s29, 1
      %p157 = por %p155, %p156
      %p159 = scmp.ne.s32.totalorder %s144, %s158
      %p160 = scmp.eq.s32.totalorder %s29, 0
      %p161 = por %p159, %p160
      %s163 = sadd.s32 %s162, 1
      %p166 = scmp.eq.s32.totalorder %s23, 1
      %p167 = scmp.ne.s32.totalorder %s162, %s164
      %p168 = scmp.eq.s32.totalorder %s23, 0
      %p169 = por %p167, %p168
      %p170 = scmp.ne.s32.totalorder %s162, %s164
      %p171 = scmp.eq.s32.totalorder %s28, 1
      %p172 = por %p170, %p171
      %p173 = scmp.ne.s32.totalorder %s164, %s165
      %p174 = scmp.eq.s32.totalorder %s28, 0
      %p175 = por %p173, %p174
      %p176 = scmp.ne.s32.totalorder %s164, %s165
      %p177 = scmp.eq.s32.totalorder %s29, 1
      %p178 = por %p176, %p177
      %p180 = scmp.ne.s32.totalorder %s165, %s179
      %p181 = scmp.eq.s32.totalorder %s29, 0
      %p182 = por %p180, %p181
      %s184 = sadd.s32 %s183, 1
      %p187 = scmp.eq.s32.totalorder %s23, 1
      %p188 = scmp.ne.s32.totalorder %s183, %s185
      %p189 = scmp.eq.s32.totalorder %s23, 0
      %p190 = por %p188, %p189
      %p191 = scmp.ne.s32.totalorder %s183, %s185
      %p192 = scmp.eq.s32.totalorder %s28, 1
      %p193 = por %p191, %p192
      %p194 = scmp.ne.s32.totalorder %s185, %s186
      %p195 = scmp.eq.s32.totalorder %s28, 0
      %p196 = por %p194, %p195
      %p197 = scmp.ne.s32.totalorder %s185, %s186
      %p198 = scmp.eq.s32.totalorder %s29, 1
      %p199 = por %p197, %p198
      %p201 = scmp.ne.s32.totalorder %s186, %s200
      %p202 = scmp.eq.s32.totalorder %s29, 0
      %p203 = por %p201, %p202
      %s204 = ssub.s32 %s23, %s30
      %p205 = scmp.eq.s32.totalorder %s204, 0
      %s207 = sadd.s32 %s206, 1
      %s208 = scalar_select %p205, %s206, %s207
      %p211 = pneg %p205
      %p212 = scmp.eq.s32.totalorder %s23, 1
      %p213 = por %p211, %p212
      %p214 = scmp.ne.s32.totalorder %s206, %s209
      %p215 = scmp.eq.s32.totalorder %s23, 0
      %p216 = por %p214, %p215
      %p217 = scmp.ne.s32.totalorder %s206, %s209
      %p218 = scmp.eq.s32.totalorder %s28, 1
      %p219 = por %p217, %p218
      %p220 = scmp.ne.s32.totalorder %s209, %s210
      %p221 = scmp.eq.s32.totalorder %s28, 0
      %p222 = por %p220, %p221
      %p223 = scmp.ne.s32.totalorder %s209, %s210
      %p224 = scmp.eq.s32.totalorder %s29, 1
      %p225 = por %p223, %p224
      %p227 = scmp.ne.s32.totalorder %s210, %s226
      %p228 = scmp.eq.s32.totalorder %s29, 0
      %p229 = por %p227, %p228
      %p230 = scmp.le.s32.totalorder 1, %s23
      %p231 = scmp.lt.s32.totalorder %s23, 3
      %p232 = pnand %p230, %p231
      %p233 = pneg %p232
      // Predicated region
      $region9: #{tpu_custom_call.1} parent=5 // pred_check
        _
      $region10: #{tpu_custom_call.1} parent=5 // pred_check_branch
        %235 = sbr.rel (%p232) target = $region12
      $region11: #{tpu_custom_call.1} parent=5 // pred_region
        %s236 = ssub.s32 %s23, 1
        // Predicated region
        $region13: #{tpu_custom_call.1} parent=11 // pred_check
          %p237 = pneg %p70
        $region14: #{tpu_custom_call.1} parent=11 // pred_check_branch
          %239 = sbr.rel (%p237) target = $region16
        $region15: #{tpu_custom_call.1} parent=11 // pred_region
          %241 = vsyncadd [#allocation6], 0
          %s242 = sshll.u32 %s1, 4
          %s243 = int_to_ptr.hbm [resolvable:$true] %s242
          %s244 = sshll.u32 [#allocation5], 4
          %s245 = int_to_ptr.vmem [resolvable:$true] %s244
          %250 = dma.hbm_to_vmem [thread:$0]  %s243, 6144, %s245, [#allocation6], 384, 384, 24
        $region16: #{tpu_custom_call.1} parent=11 // pred_fallthru
          _
        // Predicated region
        $region17: #{tpu_custom_call.1} parent=11 // pred_check
          %p251 = pneg %p91
        $region18: #{tpu_custom_call.1} parent=11 // pred_check_branch
          %253 = sbr.rel (%p251) target = $region20
        $region19: #{tpu_custom_call.1} parent=11 // pred_region
          _
        $region20: #{tpu_custom_call.1} parent=11 // pred_fallthru
          _
        // Predicated region
        $region21: #{tpu_custom_call.1} parent=11 // pred_check
          %p254 = pneg %p112
        $region22: #{tpu_custom_call.1} parent=11 // pred_check_branch
          %256 = sbr.rel (%p254) target = $region24
        $region23: #{tpu_custom_call.1} parent=11 // pred_region
          %258 = vsyncadd [#allocation6], 0
          %s259 = sshll.u32 %s3, 4
          %s260 = int_to_ptr.hbm [resolvable:$true] %s259
          %s261 = sshll.u32 [#allocation7], 4
          %s262 = int_to_ptr.vmem [resolvable:$true] %s261
          %267 = dma.hbm_to_vmem [thread:$0]  %s260, 6144, %s262, [#allocation6], 384, 384, 24
        $region24: #{tpu_custom_call.1} parent=11 // pred_fallthru
          _
        // Predicated region
        $region25: #{tpu_custom_call.1} parent=11 // pred_check
          %p268 = pneg %p133
        $region26: #{tpu_custom_call.1} parent=11 // pred_check_branch
          %270 = sbr.rel (%p268) target = $region28
        $region27: #{tpu_custom_call.1} parent=11 // pred_region
          _
        $region28: #{tpu_custom_call.1} parent=11 // pred_fallthru
          _
        // Predicated region
        $region29: #{tpu_custom_call.1} parent=11 // pred_check
          %p271 = pneg %p154
        $region30: #{tpu_custom_call.1} parent=11 // pred_check_branch
          %273 = sbr.rel (%p271) target = $region32
        $region31: #{tpu_custom_call.1} parent=11 // pred_region
          %275 = vsyncadd [#allocation9], 0
          %s276 = sshll.u32 %s5, 4
          %s277 = int_to_ptr.hbm [resolvable:$true] %s276
          %s278 = sshll.u32 [#allocation8], 4
          %s279 = int_to_ptr.vmem [resolvable:$true] %s278
          %284 = dma.hbm_to_vmem [thread:$0]  %s277, 2048, %s279, [#allocation9], 128, 128, 8
        $region32: #{tpu_custom_call.1} parent=11 // pred_fallthru
          _
        // Predicated region
        $region33: #{tpu_custom_call.1} parent=11 // pred_check
          %p285 = pneg %p175
        $region34: #{tpu_custom_call.1} parent=11 // pred_check_branch
          %287 = sbr.rel (%p285) target = $region36
        $region35: #{tpu_custom_call.1} parent=11 // pred_region
          %289 = vsyncadd [#allocation9], 0
          %s290 = sshll.u32 %s6, 4
          %s291 = int_to_ptr.hbm [resolvable:$true] %s290
          %s292 = sshll.u32 [#allocation10], 4
          %s293 = int_to_ptr.vmem [resolvable:$true] %s292
          %298 = dma.hbm_to_vmem [thread:$0]  %s291, 2048, %s293, [#allocation9], 128, 128, 8
        $region36: #{tpu_custom_call.1} parent=11 // pred_fallthru
          _
        // Predicated region
        $region37: #{tpu_custom_call.1} parent=11 // pred_check
          %p299 = pneg %p196
        $region38: #{tpu_custom_call.1} parent=11 // pred_check_branch
          %301 = sbr.rel (%p299) target = $region40
        $region39: #{tpu_custom_call.1} parent=11 // pred_region
          %303 = vsyncadd [#allocation12], 0
          %s304 = sshll.u32 %s7, 4
          %s305 = int_to_ptr.hbm [resolvable:$true] %s304
          %s306 = sshll.u32 [#allocation11], 4
          %s307 = int_to_ptr.vmem [resolvable:$true] %s306
          %312 = dma.hbm_to_vmem [thread:$0]  %s305, 2048, %s307, [#allocation12], 128, 128, 8
        $region40: #{tpu_custom_call.1} parent=11 // pred_fallthru
          _
      $region12: #{tpu_custom_call.1} parent=5 // pred_fallthru
        _
      %p313 = scmp.lt.s32.totalorder %s23, 2
      // Predicated region
      $region41: #{tpu_custom_call.1} parent=5 // pred_check
        %p314 = pneg %p313
      $region42: #{tpu_custom_call.1} parent=5 // pred_check_branch
        %316 = sbr.rel (%p314) target = $region44
      $region43: #{tpu_custom_call.1} parent=5 // pred_region
        // Predicated region
        $region45: #{tpu_custom_call.1} parent=43 // pred_check
          %p317 = pneg %p43
        $region46: #{tpu_custom_call.1} parent=43 // pred_check_branch
          %319 = sbr.rel (%p317) target = $region48
        $region47: #{tpu_custom_call.1} parent=43 // pred_region
          %s320 = sand.u32 %s33, 1
          %s321 = scalar_lea.sflag [#allocation3], %s320
          %s322 = sand.u32 %s33, 1
          %s323 = smul.addr %s322, 16
          %s324 = scalar_lea.vmem [#allocation2], %s323
          %326 = vsyncadd %s321, 0
          %s327 = smul.addr %s23, 2
          %s328 = smul.addr %s327, 8
          %s329 = scalar_lea.hbm %s0, %s328
          %s330 = sshll.u32 %s329, 4
          %s331 = int_to_ptr.hbm [resolvable:$true] %s330
          %s332 = sshll.u32 %s324, 4
          %s333 = int_to_ptr.vmem [resolvable:$true] %s332
          %338 = dma.hbm_to_vmem [thread:$0]  %s331, 256, %s333, %s321, 128, 128, 8
        $region48: #{tpu_custom_call.1} parent=43 // pred_fallthru
          _
      $region44: #{tpu_custom_call.1} parent=5 // pred_fallthru
        _
      %p339 = scmp.le.s32.totalorder 1, %s23
      %p340 = scmp.lt.s32.totalorder %s23, 3
      %p341 = pnand %p339, %p340
      %p342 = pneg %p341
      // Predicated region
      $region49: #{tpu_custom_call.1} parent=5 // pred_check
        _
      $region50: #{tpu_custom_call.1} parent=5 // pred_check_branch
        %344 = sbr.rel (%p341) target = $region52
      $region51: #{tpu_custom_call.1} parent=5 // pred_region
        %s345 = ssub.s32 %s23, 1
        %s346 = sand.u32 %s36, 1
        %s347 = scalar_lea.sflag [#allocation3], %s346
        %s348 = sand.u32 %s36, 1
        %s349 = smul.addr %s348, 16
        %s350 = scalar_lea.vmem [#allocation2], %s349
        // Predicated region
        $region53: #{tpu_custom_call.1} parent=51 // pred_check
          %p351 = pneg %p49
        $region54: #{tpu_custom_call.1} parent=51 // pred_check_branch
          %353 = sbr.rel (%p351) target = $region56
        $region55: #{tpu_custom_call.1} parent=51 // pred_region
          %355 = dma.done %s347, 256
        $region56: #{tpu_custom_call.1} parent=51 // pred_fallthru
          _
        // Predicated region
        $region57: #{tpu_custom_call.1} parent=51 // pred_check
          %p356 = pneg %p70
        $region58: #{tpu_custom_call.1} parent=51 // pred_check_branch
          %358 = sbr.rel (%p356) target = $region60
        $region59: #{tpu_custom_call.1} parent=51 // pred_region
          %360 = dma.done [#allocation6], 6144
        $region60: #{tpu_custom_call.1} parent=51 // pred_fallthru
          _
        // Predicated region
        $region61: #{tpu_custom_call.1} parent=51 // pred_check
          %p361 = pneg %p112
        $region62: #{tpu_custom_call.1} parent=51 // pred_check_branch
          %363 = sbr.rel (%p361) target = $region64
        $region63: #{tpu_custom_call.1} parent=51 // pred_region
          %365 = dma.done [#allocation6], 6144
        $region64: #{tpu_custom_call.1} parent=51 // pred_fallthru
          _
        // Predicated region
        $region65: #{tpu_custom_call.1} parent=51 // pred_check
          %p366 = pneg %p154
        $region66: #{tpu_custom_call.1} parent=51 // pred_check_branch
          %368 = sbr.rel (%p366) target = $region68
        $region67: #{tpu_custom_call.1} parent=51 // pred_region
          %370 = dma.done [#allocation9], 2048
        $region68: #{tpu_custom_call.1} parent=51 // pred_fallthru
          _
        // Predicated region
        $region69: #{tpu_custom_call.1} parent=51 // pred_check
          %p371 = pneg %p175
        $region70: #{tpu_custom_call.1} parent=51 // pred_check_branch
          %373 = sbr.rel (%p371) target = $region72
        $region71: #{tpu_custom_call.1} parent=51 // pred_region
          %375 = dma.done [#allocation9], 2048
        $region72: #{tpu_custom_call.1} parent=51 // pred_fallthru
          _
        // Predicated region
        $region73: #{tpu_custom_call.1} parent=51 // pred_check
          %p376 = pneg %p196
        $region74: #{tpu_custom_call.1} parent=51 // pred_check_branch
          %378 = sbr.rel (%p376) target = $region76
        $region75: #{tpu_custom_call.1} parent=51 // pred_region
          %380 = dma.done [#allocation12], 2048
        $region76: #{tpu_custom_call.1} parent=51 // pred_fallthru
          _
        %s381 = sand.u32 %s36, 1
        %s382 = scalar_lea.sflag [#allocation3], %s381
        %s383 = sand.u32 %s36, 1
        %s384 = smul.addr %s383, 16
        %s385 = scalar_lea.vmem [#allocation2], %s384
        %p386 = pneg %p49
        %p387 = pneg %p46
        %p388 = pneg %p70
        %p389 = pneg %p67
        %p390 = pneg %p91
        %p391 = pneg %p88
        %p392 = pneg %p112
        %p393 = pneg %p109
        %p394 = pneg %p133
        %p395 = pneg %p130
        %p396 = pneg %p154
        %p397 = pneg %p151
        %p398 = pneg %p175
        %p399 = pneg %p172
        %p400 = pneg %p196
        %p401 = pneg %p193
        %p402 = pneg %p222
        %p403 = pneg %p219
        %s404 = sand.u32 %s209, 1
        %s405 = scalar_lea.sflag [#allocation4], %s404
        %s406 = sand.u32 %s209, 1
        %s407 = smul.addr %s406, 16
        %s408 = scalar_lea.vmem [#allocation13], %s407
        %v409 = vld [vmem:[%s350] sm:$0xff]
        %v410 = vld [vmem:[%s350 + $0x8] sm:$0xff]
        %v411 = vlaneseq
        %v412 = vshrl.u32 %v411, 7
        %v413 = vadd.s32 %v412, 8
        %vm414 = vcmp.lt.s32.totalorder %v412, 0
        %v415 = vsub.s32 0, %v412
        %v416 = vsel %vm414, %v415, %v412
        %v417 = vshrl.u32 %v416, 4
        %v418 = vand.u32 %v416, 15
        %v419 = vsub.s32 0, %v418
        %v420 = vsel %vm414, %v419, %v418
        %vm421 = vcmp.lt.s32.totalorder %v413, 0
        %v422 = vsub.s32 0, %v413
        %v423 = vsel %vm421, %v422, %v413
        %v424 = vshrl.u32 %v423, 4
        %v425 = vand.u32 %v423, 15
        %v426 = vsub.s32 0, %v425
        %v427 = vsel %vm421, %v426, %v425
        %vm428 = vcmp.ne.s32.totalorder %v420, 0
        %vm429 = vcmp.ne.s32.totalorder %v427, 0
        %vm430 = vcmp.lt.s32.totalorder %v420, 0
        %vm431 = vcmp.lt.s32.totalorder %v427, 0
        %vm432 = vmand %vm430, %vm428
        %vm433 = vmand %vm431, %vm429
        %v434 = vadd.s32 %v420, 16
        %v435 = vadd.s32 %v427, 16
        %v436 = vsel %vm432, %v434, %v420
        %v437 = vsel %vm433, %v435, %v427
        %vm438 = vcmp.eq.s32.totalorder %v436, 0
        %vm439 = vcmp.eq.s32.totalorder %v437, 0
        %vm440 = vcmp.eq.s32.totalorder %v436, 15
        %vm441 = vcmp.eq.s32.totalorder %v437, 15
        %v442 = vadd.f32 %v409, %v410
        %v443 = vrot.slane %v442, 4
        %v444 = vadd.f32 %v442, %v443
        %v445 = vrot.slane %v444, 2
        %v446 = vadd.f32 %v444, %v445
        %v447 = vrot.slane %v446, 1
        %v448 = vadd.f32 %v446, %v447
        %v449 = vmul.f32 %v409, %v409
        %v450 = vmul.f32 %v410, %v410
        %v451 = vadd.f32 %v449, %v450
        %v452 = vrot.slane %v451, 4
        %v453 = vadd.f32 %v451, %v452
        %v454 = vrot.slane %v453, 2
        %v455 = vadd.f32 %v453, %v454
        %v456 = vrot.slane %v455, 1
        %v457 = vadd.f32 %v455, %v456
        %vm458 = vcmask 1040384
        %v459 = vsel %vm458, %v448, %v457
        %v460 = vld [vmem:[#allocation10] sm:$0xff]
        %v461 = vld [vmem:[#allocation10 + $0x8] sm:$0xff]
        %v462 = vld [vmem:[#allocation10 + $0x10] sm:$0xff]
        %v463 = vld [vmem:[#allocation10 + $0x18] sm:$0xff]
        %v464 = vld [vmem:[#allocation10 + $0x20] sm:$0xff]
        %v465 = vld [vmem:[#allocation10 + $0x28] sm:$0xff]
        %v466 = vld [vmem:[#allocation10 + $0x30] sm:$0xff]
        %v467 = vld [vmem:[#allocation10 + $0x38] sm:$0xff]
        %v468 = vld [vmem:[#allocation10 + $0x40] sm:$0xff]
        %v469 = vld [vmem:[#allocation10 + $0x48] sm:$0xff]
        %v470 = vld [vmem:[#allocation10 + $0x50] sm:$0xff]
        %v471 = vld [vmem:[#allocation10 + $0x58] sm:$0xff]
        %v472 = vld [vmem:[#allocation10 + $0x60] sm:$0xff]
        %v473 = vld [vmem:[#allocation10 + $0x68] sm:$0xff]
        %v474 = vld [vmem:[#allocation10 + $0x70] sm:$0xff]
        %v475 = vld [vmem:[#allocation10 + $0x78] sm:$0xff]
        %476 = vmatpush.msra.mxu0 %v475
        %477 = vmatpush.msra.mxu0 %v474
        %478 = vmatpush.msra.mxu0 %v473
        %479 = vmatpush.msra.mxu0 %v472
        %480 = vmatpush.msra.mxu0 %v471
        %481 = vmatpush.msra.mxu0 %v470
        %482 = vmatpush.msra.mxu0 %v469
        %483 = vmatpush.msra.mxu0 %v468
        %484 = vmatpush.msra.mxu0 %v467
        %485 = vmatpush.msra.mxu0 %v466
        %486 = vmatpush.msra.mxu0 %v465
        %487 = vmatpush.msra.mxu0 %v464
        %488 = vmatpush.msra.mxu0 %v463
        %489 = vmatpush.msra.mxu0 %v462
        %490 = vmatpush.msra.mxu0 %v461
        %491 = vmatpush.msra.mxu0 %v460
        %492 = vmatmul.f32.gmra.mxu0 %v459
        %v493 = vpop.f32.mrf.mxu0
        %v494 = vadd.f32 0.0, %v493
        %495 = vdwg.mxu0
        %v496 = vmul.f32 %v494, 0.00390625
        %v497 = vmul.f32 %v496, %v496
        %v499 = vrot.slane %v497, 7
        %v501 = vsub.f32 %v496, %v499
        %v502 = vperm.slane %v496, 0
        %v503 = vsub.f32 %v409, %v502
        %v504 = vsub.f32 %v410, %v502
        %v505 = vadd.f32 %v501, 1e-05
        %v506 = vrsqrt.pop %v505
        %v507 = vmul.f32 %v506, %v505
        %v508 = vmul.f32 %v507, %v506
        %v509 = vmul.f32 0.5, %v508
        %v510 = vsub.f32 1.5, %v509
        %v511 = vmul.f32 %v506, %v510
        %vm512 = vweird.f32 %v505
        %vm513 = vweird.f32 %v506
        %vm514 = vmor %vm512, %vm513
        %v515 = vsel %vm514, %v506, %v511
        %v516 = vperm.slane %v515, 1
        %v517 = vmul.f32 %v503, %v516
        %v518 = vmul.f32 %v504, %v516
        %vm519 = vcmp.ge.f32.partialorder %v517, 0.0
        %vm520 = vcmp.ge.f32.partialorder %v518, 0.0
        %v521 = vmul.f32 %v517, 0.01
        %v522 = vmul.f32 %v518, 0.01
        %v523 = vsel %vm519, %v517, %v521
        %v524 = vsel %vm520, %v518, %v522
        %v525 = vld [vmem:[#allocation5] sm:$0xff]
        %v526 = vld [vmem:[#allocation5 + $0x8] sm:$0xff]
        %v527 = vld [vmem:[#allocation5 + $0x10] sm:$0xff]
        %v528 = vld [vmem:[#allocation5 + $0x18] sm:$0xff]
        %v529 = vld [vmem:[#allocation5 + $0x20] sm:$0xff]
        %v530 = vld [vmem:[#allocation5 + $0x28] sm:$0xff]
        %v531 = vld [vmem:[#allocation5 + $0x30] sm:$0xff]
        %v532 = vld [vmem:[#allocation5 + $0x38] sm:$0xff]
        %v533 = vld [vmem:[#allocation5 + $0x40] sm:$0xff]
        %v534 = vld [vmem:[#allocation5 + $0x48] sm:$0xff]
        %v535 = vld [vmem:[#allocation5 + $0x50] sm:$0xff]
        %v536 = vld [vmem:[#allocation5 + $0x58] sm:$0xff]
        %v537 = vld [vmem:[#allocation5 + $0x60] sm:$0xff]
        %v538 = vld [vmem:[#allocation5 + $0x68] sm:$0xff]
        %v539 = vld [vmem:[#allocation5 + $0x70] sm:$0xff]
        %v540 = vld [vmem:[#allocation5 + $0x78] sm:$0xff]
        %v541 = vld [vmem:[#allocation5 + $0x80] sm:$0xff]
        %v542 = vld [vmem:[#allocation5 + $0x88] sm:$0xff]
        %v543 = vld [vmem:[#allocation5 + $0x90] sm:$0xff]
        %v544 = vld [vmem:[#allocation5 + $0x98] sm:$0xff]
        %v545 = vld [vmem:[#allocation5 + $0xa0] sm:$0xff]
        %v546 = vld [vmem:[#allocation5 + $0xa8] sm:$0xff]
        %v547 = vld [vmem:[#allocation5 + $0xb0] sm:$0xff]
        %v548 = vld [vmem:[#allocation5 + $0xb8] sm:$0xff]
        %v549 = vld [vmem:[#allocation5 + $0xc0] sm:$0xff]
        %v550 = vld [vmem:[#allocation5 + $0xc8] sm:$0xff]
        %v551 = vld [vmem:[#allocation5 + $0xd0] sm:$0xff]
        %v552 = vld [vmem:[#allocation5 + $0xd8] sm:$0xff]
        %v553 = vld [vmem:[#allocation5 + $0xe0] sm:$0xff]
        %v554 = vld [vmem:[#allocation5 + $0xe8] sm:$0xff]
        %v555 = vld [vmem:[#allocation5 + $0xf0] sm:$0xff]
        %v556 = vld [vmem:[#allocation5 + $0xf8] sm:$0xff]
        %v557 = vld [vmem:[#allocation5 + $0x100] sm:$0xff]
        %v558 = vld [vmem:[#allocation5 + $0x108] sm:$0xff]
        %v559 = vld [vmem:[#allocation5 + $0x110] sm:$0xff]
        %v560 = vld [vmem:[#allocation5 + $0x118] sm:$0xff]
        %v561 = vld [vmem:[#allocation5 + $0x120] sm:$0xff]
        %v562 = vld [vmem:[#allocation5 + $0x128] sm:$0xff]
        %v563 = vld [vmem:[#allocation5 + $0x130] sm:$0xff]
        %v564 = vld [vmem:[#allocation5 + $0x138] sm:$0xff]
        %v565 = vld [vmem:[#allocation5 + $0x140] sm:$0xff]
        %v566 = vld [vmem:[#allocation5 + $0x148] sm:$0xff]
        %v567 = vld [vmem:[#allocation5 + $0x150] sm:$0xff]
        %v568 = vld [vmem:[#allocation5 + $0x158] sm:$0xff]
        %v569 = vld [vmem:[#allocation5 + $0x160] sm:$0xff]
        %v570 = vld [vmem:[#allocation5 + $0x168] sm:$0xff]
        %v571 = vld [vmem:[#allocation5 + $0x170] sm:$0xff]
        %v572 = vld [vmem:[#allocation5 + $0x178] sm:$0xff]
        %573 = vmatpush.msra.mxu0 %v570
        %574 = vmatpush.msra.mxu0 %v567
        %575 = vmatpush.msra.mxu0 %v564
        %576 = vmatpush.msra.mxu0 %v561
        %577 = vmatpush.msra.mxu0 %v558
        %578 = vmatpush.msra.mxu0 %v555
        %579 = vmatpush.msra.mxu0 %v552
        %580 = vmatpush.msra.mxu0 %v549
        %581 = vmatpush.msra.mxu0 %v546
        %582 = vmatpush.msra.mxu0 %v543
        %583 = vmatpush.msra.mxu0 %v540
        %584 = vmatpush.msra.mxu0 %v537
        %585 = vmatpush.msra.mxu0 %v534
        %586 = vmatpush.msra.mxu0 %v531
        %587 = vmatpush.msra.mxu0 %v528
        %588 = vmatpush.msra.mxu0 %v525
        %589 = vmatmul.f32.gmra.mxu0 %v523
        %v590 = vpop.f32.mrf.mxu0
        %v591 = vadd.f32 0.0, %v590
        %592 = vmatmul.f32.gmra.mxu0 %v524
        %v593 = vpop.f32.mrf.mxu0
        %v594 = vadd.f32 0.0, %v593
        %595 = vdwg.mxu0
        %596 = vmatpush.msra.mxu0 %v571
        %597 = vmatpush.msra.mxu0 %v568
        %598 = vmatpush.msra.mxu0 %v565
        %599 = vmatpush.msra.mxu0 %v562
        %600 = vmatpush.msra.mxu0 %v559
        %601 = vmatpush.msra.mxu0 %v556
        %602 = vmatpush.msra.mxu0 %v553
        %603 = vmatpush.msra.mxu0 %v550
        %604 = vmatpush.msra.mxu0 %v547
        %605 = vmatpush.msra.mxu0 %v544
        %606 = vmatpush.msra.mxu0 %v541
        %607 = vmatpush.msra.mxu0 %v538
        %608 = vmatpush.msra.mxu0 %v535
        %609 = vmatpush.msra.mxu0 %v532
        %610 = vmatpush.msra.mxu0 %v529
        %611 = vmatpush.msra.mxu0 %v526
        %612 = vmatmul.f32.gmra.mxu0 %v523
        %v613 = vpop.f32.mrf.mxu0
        %v614 = vadd.f32 0.0, %v613
        %615 = vmatmul.f32.gmra.mxu0 %v524
        %v616 = vpop.f32.mrf.mxu0
        %v617 = vadd.f32 0.0, %v616
        %618 = vdwg.mxu0
        %619 = vmatpush.msra.mxu0 %v572
        %620 = vmatpush.msra.mxu0 %v569
        %621 = vmatpush.msra.mxu0 %v566
        %622 = vmatpush.msra.mxu0 %v563
        %623 = vmatpush.msra.mxu0 %v560
        %624 = vmatpush.msra.mxu0 %v557
        %625 = vmatpush.msra.mxu0 %v554
        %626 = vmatpush.msra.mxu0 %v551
        %627 = vmatpush.msra.mxu0 %v548
        %628 = vmatpush.msra.mxu0 %v545
        %629 = vmatpush.msra.mxu0 %v542
        %630 = vmatpush.msra.mxu0 %v539
        %631 = vmatpush.msra.mxu0 %v536
        %632 = vmatpush.msra.mxu0 %v533
        %633 = vmatpush.msra.mxu0 %v530
        %634 = vmatpush.msra.mxu0 %v527
        %635 = vmatmul.f32.gmra.mxu0 %v523
        %v636 = vpop.f32.mrf.mxu0
        %v637 = vadd.f32 0.0, %v636
        %638 = vmatmul.f32.gmra.mxu0 %v524
        %v639 = vpop.f32.mrf.mxu0
        %v640 = vadd.f32 0.0, %v639
        %641 = vdwg.mxu0
        %v642 = vrot.slane %v591, 7
        %v643 = vrot.slane %v594, 7
        %vm644 = vcmp.lt.s32.totalorder %v412, 1
        %v645 = vsel %vm644, %v642, %v643
        %v646 = vsel %vm644, %v643, %v642
        %v647 = vsel %vm438, 1, 0
        %v648 = vsel %vm439, 1, 0
        %vm649 = vcmp.eq.s32.totalorder %v647, 1
        %vm650 = vcmp.eq.s32.totalorder %v648, 1
        %v651 = vsel %vm649, 0.0, %v646
        %v652 = vsel %vm650, 0.0, %v645
        %v653 = vrot.slane %v637, 1
        %v654 = vrot.slane %v640, 1
        %vm655 = vcmp.lt.s32.totalorder %v412, 7
        %v656 = vsel %vm655, %v653, %v654
        %v657 = vsel %vm655, %v654, %v653
        %v658 = vsel %vm440, 1, 0
        %v659 = vsel %vm441, 1, 0
        %vm660 = vcmp.eq.s32.totalorder %v658, 1
        %vm661 = vcmp.eq.s32.totalorder %v659, 1
        %v662 = vsel %vm660, 0.0, %v656
        %v663 = vsel %vm661, 0.0, %v657
        %v664 = vadd.f32 %v614, %v651
        %v665 = vadd.f32 %v617, %v652
        %v666 = vadd.f32 %v664, %v662
        %v667 = vadd.f32 %v665, %v663
        %v668 = vld [vmem:[%s2] sm:$0x1]
        %v670 = vperm.slane %v668, 0
        %v672 = vadd.f32 %v666, %v670
        %v673 = vadd.f32 %v667, %v670
        %v674 = vadd.f32 %v672, %v673
        %v675 = vrot.slane %v674, 4
        %v676 = vadd.f32 %v674, %v675
        %v677 = vrot.slane %v676, 2
        %v678 = vadd.f32 %v676, %v677
        %v679 = vrot.slane %v678, 1
        %v680 = vadd.f32 %v678, %v679
        %v681 = vmul.f32 %v672, %v672
        %v682 = vmul.f32 %v673, %v673
        %v683 = vadd.f32 %v681, %v682
        %v684 = vrot.slane %v683, 4
        %v685 = vadd.f32 %v683, %v684
        %v686 = vrot.slane %v685, 2
        %v687 = vadd.f32 %v685, %v686
        %v688 = vrot.slane %v687, 1
        %v689 = vadd.f32 %v687, %v688
        %v690 = vsel %vm458, %v680, %v689
        %v691 = vld [vmem:[#allocation11] sm:$0xff]
        %v692 = vld [vmem:[#allocation11 + $0x8] sm:$0xff]
        %v693 = vld [vmem:[#allocation11 + $0x10] sm:$0xff]
        %v694 = vld [vmem:[#allocation11 + $0x18] sm:$0xff]
        %v695 = vld [vmem:[#allocation11 + $0x20] sm:$0xff]
        %v696 = vld [vmem:[#allocation11 + $0x28] sm:$0xff]
        %v697 = vld [vmem:[#allocation11 + $0x30] sm:$0xff]
        %v698 = vld [vmem:[#allocation11 + $0x38] sm:$0xff]
        %v699 = vld [vmem:[#allocation11 + $0x40] sm:$0xff]
        %v700 = vld [vmem:[#allocation11 + $0x48] sm:$0xff]
        %v701 = vld [vmem:[#allocation11 + $0x50] sm:$0xff]
        %v702 = vld [vmem:[#allocation11 + $0x58] sm:$0xff]
        %v703 = vld [vmem:[#allocation11 + $0x60] sm:$0xff]
        %v704 = vld [vmem:[#allocation11 + $0x68] sm:$0xff]
        %v705 = vld [vmem:[#allocation11 + $0x70] sm:$0xff]
        %v706 = vld [vmem:[#allocation11 + $0x78] sm:$0xff]
        %707 = vmatpush.msra.mxu0 %v706
        %708 = vmatpush.msra.mxu0 %v705
        %709 = vmatpush.msra.mxu0 %v704
        %710 = vmatpush.msra.mxu0 %v703
        %711 = vmatpush.msra.mxu0 %v702
        %712 = vmatpush.msra.mxu0 %v701
        %713 = vmatpush.msra.mxu0 %v700
        %714 = vmatpush.msra.mxu0 %v699
        %715 = vmatpush.msra.mxu0 %v698
        %716 = vmatpush.msra.mxu0 %v697
        %717 = vmatpush.msra.mxu0 %v696
        %718 = vmatpush.msra.mxu0 %v695
        %719 = vmatpush.msra.mxu0 %v694
        %720 = vmatpush.msra.mxu0 %v693
        %721 = vmatpush.msra.mxu0 %v692
        %722 = vmatpush.msra.mxu0 %v691
        %723 = vmatmul.f32.gmra.mxu0 %v690
        %v724 = vpop.f32.mrf.mxu0
        %v725 = vadd.f32 0.0, %v724
        %726 = vdwg.mxu0
        %v727 = vmul.f32 %v725, 0.00390625
        %v728 = vmul.f32 %v727, %v727
        %v730 = vrot.slane %v728, 7
        %v732 = vsub.f32 %v727, %v730
        %v733 = vperm.slane %v727, 0
        %v734 = vsub.f32 %v672, %v733
        %v735 = vsub.f32 %v673, %v733
        %v736 = vadd.f32 %v732, 1e-05
        %v737 = vrsqrt.pop %v736
        %v738 = vmul.f32 %v737, %v736
        %v739 = vmul.f32 %v738, %v737
        %v740 = vmul.f32 0.5, %v739
        %v741 = vsub.f32 1.5, %v740
        %v742 = vmul.f32 %v737, %v741
        %vm743 = vweird.f32 %v736
        %vm744 = vweird.f32 %v737
        %vm745 = vmor %vm743, %vm744
        %v746 = vsel %vm745, %v737, %v742
        %v747 = vperm.slane %v746, 1
        %v748 = vmul.f32 %v734, %v747
        %v749 = vmul.f32 %v735, %v747
        %vm750 = vcmp.ge.f32.partialorder %v748, 0.0
        %vm751 = vcmp.ge.f32.partialorder %v749, 0.0
        %v752 = vmul.f32 %v748, 0.01
        %v753 = vmul.f32 %v749, 0.01
        %v754 = vsel %vm750, %v748, %v752
        %v755 = vsel %vm751, %v749, %v753
        %v756 = vld [vmem:[#allocation7] sm:$0xff]
        %v757 = vld [vmem:[#allocation7 + $0x8] sm:$0xff]
        %v758 = vld [vmem:[#allocation7 + $0x10] sm:$0xff]
        %v759 = vld [vmem:[#allocation7 + $0x18] sm:$0xff]
        %v760 = vld [vmem:[#allocation7 + $0x20] sm:$0xff]
        %v761 = vld [vmem:[#allocation7 + $0x28] sm:$0xff]
        %v762 = vld [vmem:[#allocation7 + $0x30] sm:$0xff]
        %v763 = vld [vmem:[#allocation7 + $0x38] sm:$0xff]
        %v764 = vld [vmem:[#allocation7 + $0x40] sm:$0xff]
        %v765 = vld [vmem:[#allocation7 + $0x48] sm:$0xff]
        %v766 = vld [vmem:[#allocation7 + $0x50] sm:$0xff]
        %v767 = vld [vmem:[#allocation7 + $0x58] sm:$0xff]
        %v768 = vld [vmem:[#allocation7 + $0x60] sm:$0xff]
        %v769 = vld [vmem:[#allocation7 + $0x68] sm:$0xff]
        %v770 = vld [vmem:[#allocation7 + $0x70] sm:$0xff]
        %v771 = vld [vmem:[#allocation7 + $0x78] sm:$0xff]
        %v772 = vld [vmem:[#allocation7 + $0x80] sm:$0xff]
        %v773 = vld [vmem:[#allocation7 + $0x88] sm:$0xff]
        %v774 = vld [vmem:[#allocation7 + $0x90] sm:$0xff]
        %v775 = vld [vmem:[#allocation7 + $0x98] sm:$0xff]
        %v776 = vld [vmem:[#allocation7 + $0xa0] sm:$0xff]
        %v777 = vld [vmem:[#allocation7 + $0xa8] sm:$0xff]
        %v778 = vld [vmem:[#allocation7 + $0xb0] sm:$0xff]
        %v779 = vld [vmem:[#allocation7 + $0xb8] sm:$0xff]
        %v780 = vld [vmem:[#allocation7 + $0xc0] sm:$0xff]
        %v781 = vld [vmem:[#allocation7 + $0xc8] sm:$0xff]
        %v782 = vld [vmem:[#allocation7 + $0xd0] sm:$0xff]
        %v783 = vld [vmem:[#allocation7 + $0xd8] sm:$0xff]
        %v784 = vld [vmem:[#allocation7 + $0xe0] sm:$0xff]
        %v785 = vld [vmem:[#allocation7 + $0xe8] sm:$0xff]
        %v786 = vld [vmem:[#allocation7 + $0xf0] sm:$0xff]
        %v787 = vld [vmem:[#allocation7 + $0xf8] sm:$0xff]
        %v788 = vld [vmem:[#allocation7 + $0x100] sm:$0xff]
        %v789 = vld [vmem:[#allocation7 + $0x108] sm:$0xff]
        %v790 = vld [vmem:[#allocation7 + $0x110] sm:$0xff]
        %v791 = vld [vmem:[#allocation7 + $0x118] sm:$0xff]
        %v792 = vld [vmem:[#allocation7 + $0x120] sm:$0xff]
        %v793 = vld [vmem:[#allocation7 + $0x128] sm:$0xff]
        %v794 = vld [vmem:[#allocation7 + $0x130] sm:$0xff]
        %v795 = vld [vmem:[#allocation7 + $0x138] sm:$0xff]
        %v796 = vld [vmem:[#allocation7 + $0x140] sm:$0xff]
        %v797 = vld [vmem:[#allocation7 + $0x148] sm:$0xff]
        %v798 = vld [vmem:[#allocation7 + $0x150] sm:$0xff]
        %v799 = vld [vmem:[#allocation7 + $0x158] sm:$0xff]
        %v800 = vld [vmem:[#allocation7 + $0x160] sm:$0xff]
        %v801 = vld [vmem:[#allocation7 + $0x168] sm:$0xff]
        %v802 = vld [vmem:[#allocation7 + $0x170] sm:$0xff]
        %v803 = vld [vmem:[#allocation7 + $0x178] sm:$0xff]
        %804 = vmatpush.msra.mxu0 %v801
        %805 = vmatpush.msra.mxu0 %v798
        %806 = vmatpush.msra.mxu0 %v795
        %807 = vmatpush.msra.mxu0 %v792
        %808 = vmatpush.msra.mxu0 %v789
        %809 = vmatpush.msra.mxu0 %v786
        %810 = vmatpush.msra.mxu0 %v783
        %811 = vmatpush.msra.mxu0 %v780
        %812 = vmatpush.msra.mxu0 %v777
        %813 = vmatpush.msra.mxu0 %v774
        %814 = vmatpush.msra.mxu0 %v771
        %815 = vmatpush.msra.mxu0 %v768
        %816 = vmatpush.msra.mxu0 %v765
        %817 = vmatpush.msra.mxu0 %v762
        %818 = vmatpush.msra.mxu0 %v759
        %819 = vmatpush.msra.mxu0 %v756
        %820 = vmatmul.f32.gmra.mxu0 %v754
        %v821 = vpop.f32.mrf.mxu0
        %v822 = vadd.f32 0.0, %v821
        %823 = vmatmul.f32.gmra.mxu0 %v755
        %v824 = vpop.f32.mrf.mxu0
        %v825 = vadd.f32 0.0, %v824
        %826 = vdwg.mxu0
        %827 = vmatpush.msra.mxu0 %v802
        %828 = vmatpush.msra.mxu0 %v799
        %829 = vmatpush.msra.mxu0 %v796
        %830 = vmatpush.msra.mxu0 %v793
        %831 = vmatpush.msra.mxu0 %v790
        %832 = vmatpush.msra.mxu0 %v787
        %833 = vmatpush.msra.mxu0 %v784
        %834 = vmatpush.msra.mxu0 %v781
        %835 = vmatpush.msra.mxu0 %v778
        %836 = vmatpush.msra.mxu0 %v775
        %837 = vmatpush.msra.mxu0 %v772
        %838 = vmatpush.msra.mxu0 %v769
        %839 = vmatpush.msra.mxu0 %v766
        %840 = vmatpush.msra.mxu0 %v763
        %841 = vmatpush.msra.mxu0 %v760
        %842 = vmatpush.msra.mxu0 %v757
        %843 = vmatmul.f32.gmra.mxu0 %v754
        %v844 = vpop.f32.mrf.mxu0
        %v845 = vadd.f32 0.0, %v844
        %846 = vmatmul.f32.gmra.mxu0 %v755
        %v847 = vpop.f32.mrf.mxu0
        %v848 = vadd.f32 0.0, %v847
        %849 = vdwg.mxu0
        %850 = vmatpush.msra.mxu0 %v803
        %851 = vmatpush.msra.mxu0 %v800
        %852 = vmatpush.msra.mxu0 %v797
        %853 = vmatpush.msra.mxu0 %v794
        %854 = vmatpush.msra.mxu0 %v791
        %855 = vmatpush.msra.mxu0 %v788
        %856 = vmatpush.msra.mxu0 %v785
        %857 = vmatpush.msra.mxu0 %v782
        %858 = vmatpush.msra.mxu0 %v779
        %859 = vmatpush.msra.mxu0 %v776
        %860 = vmatpush.msra.mxu0 %v773
        %861 = vmatpush.msra.mxu0 %v770
        %862 = vmatpush.msra.mxu0 %v767
        %863 = vmatpush.msra.mxu0 %v764
        %864 = vmatpush.msra.mxu0 %v761
        %865 = vmatpush.msra.mxu0 %v758
        %866 = vmatmul.f32.gmra.mxu0 %v754
        %v867 = vpop.f32.mrf.mxu0
        %v868 = vadd.f32 0.0, %v867
        %869 = vmatmul.f32.gmra.mxu0 %v755
        %v870 = vpop.f32.mrf.mxu0
        %v871 = vadd.f32 0.0, %v870
        %872 = vdwg.mxu0
        %v873 = vrot.slane %v822, 7
        %v874 = vrot.slane %v825, 7
        %v875 = vsel %vm644, %v873, %v874
        %v876 = vsel %vm644, %v874, %v873
        %v877 = vsel %vm649, 0.0, %v876
        %v878 = vsel %vm650, 0.0, %v875
        %v879 = vrot.slane %v868, 1
        %v880 = vrot.slane %v871, 1
        %v881 = vsel %vm655, %v879, %v880
        %v882 = vsel %vm655, %v880, %v879
        %v883 = vsel %vm660, 0.0, %v881
        %v884 = vsel %vm661, 0.0, %v882
        %v885 = vadd.f32 %v845, %v877
        %v886 = vadd.f32 %v848, %v878
        %v887 = vadd.f32 %v885, %v883
        %v888 = vadd.f32 %v886, %v884
        %v889 = vld [vmem:[#allocation8] sm:$0xff]
        %v890 = vld [vmem:[#allocation8 + $0x8] sm:$0xff]
        %v891 = vld [vmem:[#allocation8 + $0x10] sm:$0xff]
        %v892 = vld [vmem:[#allocation8 + $0x18] sm:$0xff]
        %v893 = vld [vmem:[#allocation8 + $0x20] sm:$0xff]
        %v894 = vld [vmem:[#allocation8 + $0x28] sm:$0xff]
        %v895 = vld [vmem:[#allocation8 + $0x30] sm:$0xff]
        %v896 = vld [vmem:[#allocation8 + $0x38] sm:$0xff]
        %v897 = vld [vmem:[#allocation8 + $0x40] sm:$0xff]
        %v898 = vld [vmem:[#allocation8 + $0x48] sm:$0xff]
        %v899 = vld [vmem:[#allocation8 + $0x50] sm:$0xff]
        %v900 = vld [vmem:[#allocation8 + $0x58] sm:$0xff]
        %v901 = vld [vmem:[#allocation8 + $0x60] sm:$0xff]
        %v902 = vld [vmem:[#allocation8 + $0x68] sm:$0xff]
        %v903 = vld [vmem:[#allocation8 + $0x70] sm:$0xff]
        %v904 = vld [vmem:[#allocation8 + $0x78] sm:$0xff]
        %905 = vmatpush.msra.mxu0 %v904
        %906 = vmatpush.msra.mxu0 %v903
        %907 = vmatpush.msra.mxu0 %v902
        %908 = vmatpush.msra.mxu0 %v901
        %909 = vmatpush.msra.mxu0 %v900
        %910 = vmatpush.msra.mxu0 %v899
        %911 = vmatpush.msra.mxu0 %v898
        %912 = vmatpush.msra.mxu0 %v897
        %913 = vmatpush.msra.mxu0 %v896
        %914 = vmatpush.msra.mxu0 %v895
        %915 = vmatpush.msra.mxu0 %v894
        %916 = vmatpush.msra.mxu0 %v893
        %917 = vmatpush.msra.mxu0 %v892
        %918 = vmatpush.msra.mxu0 %v891
        %919 = vmatpush.msra.mxu0 %v890
        %920 = vmatpush.msra.mxu0 %v889
        %921 = vmatmul.f32.gmra.mxu0 %v409
        %v922 = vpop.f32.mrf.mxu0
        %v923 = vadd.f32 0.0, %v922
        %924 = vmatmul.f32.gmra.mxu0 %v410
        %v925 = vpop.f32.mrf.mxu0
        %v926 = vadd.f32 0.0, %v925
        %927 = vdwg.mxu0
        %v928 = vadd.f32 %v887, %v923
        %v929 = vadd.f32 %v888, %v926
        %v930 = vld [vmem:[%s4] sm:$0x1]
        %v932 = vperm.slane %v930, 0
        %v934 = vadd.f32 %v928, %v932
        %v935 = vadd.f32 %v929, %v932
        %936 = vst [vmem:[%s408] sm:$0xff] %v934
        %937 = vst [vmem:[%s408 + $0x8] sm:$0xff] %v935
        %s938 = sand.u32 %s209, 1
        %s939 = scalar_lea.sflag [#allocation4], %s938
        %s940 = sand.u32 %s209, 1
        %s941 = smul.addr %s940, 16
        %s942 = scalar_lea.vmem [#allocation13], %s941
        // Predicated region
        $region77: #{tpu_custom_call.1} parent=51 // pred_check
          %p943 = pneg %p219
        $region78: #{tpu_custom_call.1} parent=51 // pred_check_branch
          %945 = sbr.rel (%p943) target = $region80
        $region79: #{tpu_custom_call.1} parent=51 // pred_region
          %947 = vsyncadd %s939, 0
          %s948 = smul.addr %s28, 2
          %s949 = smul.addr %s948, 8
          %s950 = scalar_lea.hbm %s8, %s949
          %s951 = sshll.u32 %s942, 4
          %s952 = int_to_ptr.vmem [resolvable:$true] %s951
          %s953 = sshll.u32 %s950, 4
          %s954 = int_to_ptr.hbm [resolvable:$true] %s953
          %959 = dma.vmem_to_hbm [thread:$0]  %s952, 256, %s954, %s939, 128, 128, 8
        $region80: #{tpu_custom_call.1} parent=51 // pred_fallthru
          _
      $region52: #{tpu_custom_call.1} parent=5 // pred_fallthru
        _
      %p960 = scmp.le.s32.totalorder 2, %s23
      // Predicated region
      $region81: #{tpu_custom_call.1} parent=5 // pred_check
        %p961 = pneg %p960
      $region82: #{tpu_custom_call.1} parent=5 // pred_check_branch
        %963 = sbr.rel (%p961) target = $region84
      $region83: #{tpu_custom_call.1} parent=5 // pred_region
        %s964 = ssub.s32 %s23, 2
        // Predicated region
        $region85: #{tpu_custom_call.1} parent=83 // pred_check
          %p965 = pneg %p225
        $region86: #{tpu_custom_call.1} parent=83 // pred_check_branch
          %967 = sbr.rel (%p965) target = $region88
        $region87: #{tpu_custom_call.1} parent=83 // pred_region
          %s968 = sand.u32 %s210, 1
          %s969 = scalar_lea.sflag [#allocation4], %s968
          %s970 = sand.u32 %s210, 1
          %s971 = smul.addr %s970, 16
          %s972 = scalar_lea.vmem [#allocation13], %s971
          %974 = dma.done %s969, 256
        $region88: #{tpu_custom_call.1} parent=83 // pred_fallthru
          _
      $region84: #{tpu_custom_call.1} parent=5 // pred_fallthru
        _
    $region6: #{tpu_custom_call.1} parent=1 // loop_footer
      %s27 = sadd.s32 1, %s23
    $region7: #{tpu_custom_call.1} parent=1 // loop_footer_branch
      %22 = sbr.rel target = $region3
    $region8: #{tpu_custom_call.1} parent=1 // loop_exit
      _
    %975 = vsyncpa [#allocation3], 1
    %s976 = scalar_lea.sflag [#allocation3], 1
    %977 = vsyncpa %s976, 1
    %978 = vsyncpa [#allocation6], 1
    %979 = vsyncpa [#allocation9], 1
    %980 = vsyncpa [#allocation12], 1
    %981 = vsyncpa [#allocation4], 1
    %s982 = scalar_lea.sflag [#allocation4], 1
    %983 = vsyncpa %s982, 1

</llo_original>
